<compile_context>
chip_gen: v7x
topology: tpu7x:2x2x1
jax: 0.10.0
libtpu: 0.0.40
codegen_flags: <defaults>
</compile_context>

<pallas_src>
import functools

import jax
import jax.numpy as jnp
from jax import lax
from jax.experimental import pallas as pl
from jax.experimental.pallas import tpu as pltpu


# ----------------------------------------------------------------------------
# Small helpers: VMEM budgeting / tile selection
# ----------------------------------------------------------------------------
def _rup(a, b):
    return -(-a // b) * b


def _vmem_budget_bytes(frac=0.75):
    """~96 MiB on v5e/v6e (128 MiB VMEM), ~48 MiB on v7x (64 MiB VMEM)."""
    cap = 64 * 1024 * 1024  # conservative fallback (v7x per-core VMEM)
    try:
        info = pltpu.get_tpu_info()
        cap = int(getattr(info, "vmem_capacity_bytes", cap)) or cap
    except Exception:
        pass
    return int(cap * frac)


def _conv_step_vmem_bytes(TH, Ws, Wo, K4, C_out, cd, sd):
    """Conservative per-grid-step VMEM estimate for the conv kernel."""
    Kt = 4 * K4
    m = TH * Wo
    lanes_k4 = _rup(K4, 128)
    lanes_kt = _rup(Kt, 128)
    rows_ws = _rup(Ws, 16)
    x_blk = 2 * (TH + 1) * rows_ws * lanes_k4 * cd          # double-buffered input
    lrelu = (TH + 1) * rows_ws * lanes_k4 * (4 + cd)        # f32 temp + cast copy
    col = _rup(m, 16) * lanes_kt * cd                       # im2col scratch
    acc = _rup(C_out, 8) * _rup(m, 128) * 4                 # f32 matmul result
    out = 2 * _rup(C_out, 16) * _rup(m, 128) * sd           # double-buffered output
    wgt = 2 * _rup(C_out, 16) * lanes_kt * cd               # weight block
    return x_blk + lrelu + col + acc + out + wgt


def _pick_row_tile(Ho, Ws, Wo, K4, C_out, cd, sd, budget, rows_per_step=None):
    """Largest divisor of Ho whose conv slab fits the VMEM budget and keeps the
    output block lane-dim a multiple of 128 (or the full image)."""
    if rows_per_step is not None:
        assert Ho % rows_per_step == 0, "rows_per_step must divide Ho"
        return int(rows_per_step)
    divs = [d for d in range(Ho, 0, -1) if Ho % d == 0]
    ok = [d for d in divs if d == Ho or (d * Wo) % 128 == 0]
    for d in ok:
        if _conv_step_vmem_bytes(d, Ws, Wo, K4, C_out, cd, sd) <= 0.8 * budget:
            return d
    # TODO(synk): even the smallest lane-aligned row tile exceeds the budget
    # (huge Wo * C_in); would need W-tiling / manual DMA double buffering.
    return ok[-1]


def _lane_tile(L, c_out, in_bytes, out_bytes, budget, cap_max=16384):
    """Largest lane-dense tile (multiple of 128 dividing L, or all of L) keeping
    the double-buffered BN-apply blocks well inside the VMEM budget."""
    cap = budget // max(1, 4 * c_out * (in_bytes + out_bytes))
    cap = max(128, min(cap, cap_max))
    if L <= cap:
        return L
    t = (cap // 128) * 128
    while t >= 128:
        if L % t == 0:
            return t
        t -= 128
    # TODO(synk): L has no multiple-of-128 divisor; falls back to a full-L block.
    return L


# ----------------------------------------------------------------------------
# Kernel 1: LeakyReLU + in-VMEM im2col + single-matmul conv + batch-stat partials
# ----------------------------------------------------------------------------
def _conv_stats_kernel(x_ref, w_ref, out_ref, sum_ref, ssq_ref, col_ref,
                       *, TH, Wo, K4):
    """One (TH output rows x full width) slab of one image per grid step.

    x_ref  : (1, 1, TH+1, Ws, K4)   space-to-depth rows of the padded input
                                    (+1 halo row), compute dtype
    w_ref  : (C_out, 4*K4)          conv weight, columns ordered (bh, bw, dy, dx, ci)
    out_ref: (1, C_out, TH*Wo)      conv output (bias-free), lane-dense, store dtype
    sum_ref, ssq_ref: (1, 1, C_out, 1)  per-slab channel sum / sum-of-squares (f32)
    col_ref: VMEM scratch (TH*Wo, 4*K4), compute dtype  -- explicit im2col buffer
    """
    m = TH * Wo
    # LeakyReLU exactly once per input element, in f32 (v5e VPU has no bf16 VALU);
    # cast to the MXU compute dtype only on the store into the im2col buffer.
    xa = x_ref[0, 0].astype(jnp.float32)                  # (TH+1, Ws, K4)
    xa = jnp.where(xa >= 0, xa, 0.2 * xa)
    xa = xa.astype(col_ref.dtype)

    # Explicit VMEM im2col: 4 unit-stride shifted copies -> K = 16*C_in columns,
    # so a single MXU matmul sees a 4x wider contraction dim than 4 separate dots.
    for p, (bh, bw) in enumerate(((0, 0), (0, 1), (1, 0), (1, 1))):
        col_ref[:, p * K4:(p + 1) * K4] = (
            xa[bh:bh + TH, bw:bw + Wo, :].reshape(m, K4))

    # (C_out, K) x (m, K)^T -> (C_out, m): lane-dense output directly, no acc.T.
    acc = lax.dot_general(
        w_ref[...], col_ref[...],
        dimension_numbers=(((1,), (1,)), ((), ())),
        preferred_element_type=jnp.float32)               # (C_out, m), f32

    out_ref[0] = acc.astype(out_ref.dtype)
    sum_ref[0, 0] = jnp.sum(acc, axis=-1, keepdims=True)        # (C_out, 1)
    ssq_ref[0, 0] = jnp.sum(acc * acc, axis=-1, keepdims=True)  # (C_out, 1)


# ----------------------------------------------------------------------------
# Kernel 2: BatchNorm apply  y * scale + shift  (per-channel), mem-bound
# ----------------------------------------------------------------------------
def _bn_apply_kernel(y_ref, scale_ref, shift_ref, o_ref):
    # y_ref: (1, C_out, tl) store dtype; scale/shift: (C_out, 1) f32 (lane broadcast)
    y = y_ref[...].astype(jnp.float32)
    o_ref[...] = (y * scale_ref[...] + shift_ref[...]).astype(o_ref.dtype)


# ----------------------------------------------------------------------------
# Wrapper
# ----------------------------------------------------------------------------
def recnet_encoder_part(x_nchw, conv_w, conv_b, gamma, beta, *,
                        eps=1e-5, compute_dtype=jnp.bfloat16,
                        out_dtype=jnp.float32, rows_per_step=None):
    """x_nchw: (N, C_in, H, W).  conv_w: (C_out, C_in, 4, 4).  Returns NCHW."""
    del conv_b  # cancels exactly under training-mode BatchNorm (mean subtraction)
    N, C_in, H, W = x_nchw.shape
    C_out = conv_w.shape[0]
    assert H % 2 == 0 and W % 2 == 0, "k=4, s=2, p=1 conv assumes even H and W"
    Ho, Wo = H // 2, W // 2
    Hs, Ws, K4 = Ho + 1, Wo + 1, 4 * C_in
    Kt, L = 4 * K4, Ho * Wo

    compute_dtype = jnp.dtype(compute_dtype)
    store_dtype = (jnp.dtype(jnp.bfloat16)
                   if compute_dtype == jnp.dtype(jnp.bfloat16)
                   else jnp.dtype(jnp.float32))
    out_dtype = jnp.dtype(out_dtype)
    cd, sd, od = compute_dtype.itemsize, store_dtype.itemsize, out_dtype.itemsize
    budget = _vmem_budget_bytes()

    # Layout-only preprocessing (one XLA copy fusion over the input):
    # NCHW -> NHWC -> zero-pad(1) -> 2x2 space-to-depth; zero padding commutes
    # with LeakyReLU since lrelu(0) = 0.
    x = jnp.transpose(x_nchw, (0, 2, 3, 1))
    x = jnp.pad(x, ((0, 0), (1, 1), (1, 1), (0, 0)))
    x = x.reshape(N, Hs, 2, Ws, 2, C_in)
    x = jnp.transpose(x, (0, 1, 3, 2, 4, 5))              # (N, Hs, Ws, dy, dx, ci)
    x_s2d = x.reshape(N, Hs, Ws, K4).astype(compute_dtype)

    # Output-row tiling (1 halo row) -> fits v7x VMEM + second "parallel" grid axis.
    TH = _pick_row_tile(Ho, Ws, Wo, K4, C_out, cd, sd, budget, rows_per_step)
    n_h = Ho // TH
    if n_h == 1:
        x_t = x_s2d[:, None]                              # (N, 1, Hs, Ws, K4)
    else:
        # Overlapping-row gather (~(1 + 1/TH)x input bytes, only when tiling).
        # TODO(synk): fold the 1-row halo into the kernel (masking) to avoid
        # this extra copy for very large images.
        row_idx = jnp.arange(n_h)[:, None] * TH + jnp.arange(TH + 1)[None, :]
        x_t = x_s2d[:, row_idx]                           # (N, n_h, TH+1, Ws, K4)
    m = TH * Wo

    # Weight (C_out, C_in, kh, kw) -> (C_out, 16*C_in): kh=(bh,dy), kw=(bw,dx),
    # columns ordered (bh, bw, dy, dx, ci) to match the kernel's im2col packing.
    w = conv_w.reshape(C_out, C_in, 2, 2, 2, 2)           # (co, ci, bh, dy, bw, dx)
    w = jnp.transpose(w, (0, 2, 4, 3, 5, 1))              # (co, bh, bw, dy, dx, ci)
    w2 = w.reshape(C_out, Kt).astype(compute_dtype)

    conv_out, ch_sum, ch_ssq = pl.pallas_call(
        functools.partial(_conv_stats_kernel, TH=TH, Wo=Wo, K4=K4),
        out_shape=(
            jax.ShapeDtypeStruct((N, C_out, L), store_dtype),
            jax.ShapeDtypeStruct((N, n_h, C_out, 1), jnp.float32),
            jax.ShapeDtypeStruct((N, n_h, C_out, 1), jnp.float32),
        ),
        grid=(N, n_h),
        in_specs=[
            pl.BlockSpec((1, 1, TH + 1, Ws, K4), lambda n, h: (n, h, 0, 0, 0)),
            pl.BlockSpec((C_out, Kt), lambda n, h: (0, 0)),
        ],
        out_specs=(
            pl.BlockSpec((1, C_out, m), lambda n, h: (n, 0, h)),
            pl.BlockSpec((1, 1, C_out, 1), lambda n, h: (n, h, 0, 0)),
            pl.BlockSpec((1, 1, C_out, 1), lambda n, h: (n, h, 0, 0)),
        ),
        scratch_shapes=[pltpu.VMEM((m, Kt), compute_dtype)],
        compiler_params=pltpu.CompilerParams(
            dimension_semantics=("parallel", "parallel"),
            vmem_limit_bytes=budget),
    )(x_t, w2)

    # Training-mode BatchNorm statistics (biased variance) from per-slab partials.
    # TODO(synk): for very large N*L use per-slab (mean, M2) partials (Chan/Welford)
    # instead of raw sum/ssq to reduce f32 cancellation.
    cnt = jnp.float32(N * L)
    s1 = jnp.sum(ch_sum, axis=(0, 1))                     # (C_out, 1)
    s2 = jnp.sum(ch_ssq, axis=(0, 1))                     # (C_out, 1)
    mean = s1 / cnt
    var = jnp.maximum(s2 / cnt - mean * mean, 0.0)
    inv_std = lax.rsqrt(var + eps)
    scale = gamma.astype(jnp.float32).reshape(C_out, 1) * inv_std
    shift = beta.astype(jnp.float32).reshape(C_out, 1) - mean * scale

    # BatchNorm apply: lane-dense big blocks, purely mem-bound.
    # TODO(synk): in a full network, return (conv_out, scale, shift) and fold this
    # affine into the next encoder block's LeakyReLU+conv kernel instead.
    tl = _lane_tile(L, C_out, sd, od, budget)
    y = pl.pallas_call(
        _bn_apply_kernel,
        out_shape=jax.ShapeDtypeStruct((N, C_out, L), out_dtype),
        grid=(N, L // tl),
        in_specs=[
            pl.BlockSpec((1, C_out, tl), lambda n, l: (n, 0, l)),
            pl.BlockSpec((C_out, 1), lambda n, l: (0, 0)),
            pl.BlockSpec((C_out, 1), lambda n, l: (0, 0)),
        ],
        out_specs=pl.BlockSpec((1, C_out, tl), lambda n, l: (n, 0, l)),
        compiler_params=pltpu.CompilerParams(
            dimension_semantics=("parallel", "parallel"),
            vmem_limit_bytes=budget),
    )(conv_out, scale, shift)

    return y.reshape(N, C_out, Ho, Wo)                    # free reshape: already NCHW


# ----------------------------------------------------------------------------
# Pure-JAX reference (mirrors the PyTorch module in training mode, WITH bias)
# ----------------------------------------------------------------------------
def reference(x, conv_w, conv_b, gamma, beta, eps=1e-5):
    xr = jnp.where(x >= 0, x, 0.2 * x)
    y = lax.conv_general_dilated(
        xr, conv_w, window_strides=(2, 2), padding=((1, 1), (1, 1)),
        dimension_numbers=("NCHW", "OIHW", "NCHW"))
    y = y + conv_b[None, :, None, None]
    mean = jnp.mean(y, axis=(0, 2, 3), keepdims=True)
    var = jnp.var(y, axis=(0, 2, 3), keepdims=True)
    yhat = (y - mean) * lax.rsqrt(var + eps)
    return yhat * gamma[None, :, None, None] + beta[None, :, None, None]


if __name__ == "__main__":
    N, C_in, C_out, H, W = 2, 4, 8, 16, 16

    key = jax.random.PRNGKey(0)
    kx, kw, kb, kg, kbeta = jax.random.split(key, 5)

    x = jax.random.normal(kx, (N, C_in, H, W), jnp.float32)
    conv_w = 0.1 * jax.random.normal(kw, (C_out, C_in, 4, 4), jnp.float32)
    conv_b = 0.1 * jax.random.normal(kb, (C_out,), jnp.float32)
    gamma = 1.0 + 0.1 * jax.random.normal(kg, (C_out,), jnp.float32)
    beta = 0.1 * jax.random.normal(kbeta, (C_out,), jnp.float32)

    ref = reference(x, conv_w, conv_b, gamma, beta)

    # f32 path: tight tolerance (also validates the bias/BN cancellation).
    out_f32 = jax.block_until_ready(
        recnet_encoder_part(x, conv_w, conv_b, gamma, beta,
                            compute_dtype=jnp.float32))
    assert out_f32.shape == (N, C_out, H // 2, W // 2), out_f32.shape
    err_f32 = float(jnp.max(jnp.abs(out_f32 - ref)))
    assert err_f32 < 1e-4, err_f32

    # Default path: bf16 MXU operands + bf16 conv intermediate, f32 accumulation.
    out_bf16 = jax.block_until_ready(
        recnet_encoder_part(x, conv_w, conv_b, gamma, beta))
    assert out_bf16.dtype == jnp.float32
    err_bf16 = float(jnp.max(jnp.abs(out_bf16 - ref)))
    assert err_bf16 < 0.15, err_bf16

    # Row-tiled path (n_h = 2, exercises the halo gather + (N, n_h) grid), f32.
    x2 = jax.random.normal(kx, (N, C_in, 32, 32), jnp.float32)
    ref2 = reference(x2, conv_w, conv_b, gamma, beta)
    out_t = jax.block_until_ready(
        recnet_encoder_part(x2, conv_w, conv_b, gamma, beta,
                            compute_dtype=jnp.float32, rows_per_step=8))
    err_t = float(jnp.max(jnp.abs(out_t - ref2)))
    assert err_t < 1e-4, err_t

    print("KERNEL_OK")
</pallas_src>

<mosaic_0001>
module attributes {stable_mosaic.version = 11 : i64} {
  func.func @_conv_stats_kernel(%arg0: i32, %arg1: i32, %arg2: memref<1x1x9x9x16xf32, #tpu.memory_space<vmem>>, %arg3: memref<8x64xf32, #tpu.memory_space<vmem>>, %arg4: memref<1x8x64xf32, #tpu.memory_space<vmem>>, %arg5: memref<1x1x8x1xf32, #tpu.memory_space<vmem>>, %arg6: memref<1x1x8x1xf32, #tpu.memory_space<vmem>>, %arg7: memref<64x64xf32, #tpu.memory_space<vmem>>) attributes {dimension_semantics = [#tpu.dimension_semantics<parallel>, #tpu.dimension_semantics<parallel>], iteration_bounds = array<i64: 2, 1>, scalar_prefetch = 0 : i64, scratch_operands = 1 : i64, tpu.core_type = #tpu.core_type<tc>, window_params = [{transform_indices = @transform_0, window_bounds = array<i64: 1, 1, 9, 9, 16>}, {pipeline_mode = #tpu.pipeline_mode<synchronous>, transform_indices = @transform_1, window_bounds = array<i64: 8, 64>}, {transform_indices = @transform_2, window_bounds = array<i64: 1, 8, 64>}, {transform_indices = @transform_3, window_bounds = array<i64: 1, 1, 8, 1>}, {transform_indices = @transform_4, window_bounds = array<i64: 1, 1, 8, 1>}]} {
    %c0 = arith.constant 0 : index
    %c0_0 = arith.constant 0 : index
    %c0_1 = arith.constant 0 : index
    %c0_2 = arith.constant 0 : index
    %c0_3 = arith.constant 0 : index
    %0 = vector.load %arg2[%c0, %c0_0, %c0_1, %c0_2, %c0_3] : memref<1x1x9x9x16xf32, #tpu.memory_space<vmem>>, vector<1x1x9x9x16xf32>
    %1 = vector.shape_cast %0 : vector<1x1x9x9x16xf32> to vector<9x9x16xf32>
    %cst = arith.constant 0.000000e+00 : f32
    %2 = vector.broadcast %cst : f32 to vector<9x9x16xf32>
    %3 = arith.cmpf oge, %1, %2 : vector<9x9x16xf32>
    %cst_4 = arith.constant 2.000000e-01 : f32
    %4 = vector.broadcast %cst_4 : f32 to vector<9x9x16xf32>
    %5 = arith.mulf %4, %1 : vector<9x9x16xf32>
    %6 = arith.select %3, %1, %5 : vector<9x9x16xi1>, vector<9x9x16xf32>
    %7 = vector.extract_strided_slice %6 {offsets = [0, 0, 0], sizes = [8, 8, 16], strides = [1, 1, 1]} : vector<9x9x16xf32> to vector<8x8x16xf32>
    %8 = vector.shape_cast %7 : vector<8x8x16xf32> to vector<64x16xf32>
    %c0_5 = arith.constant 0 : index
    %c0_6 = arith.constant 0 : index
    %9 = vector.load %arg7[%c0_5, %c0_6] : memref<64x64xf32, #tpu.memory_space<vmem>>, vector<64x16xf32>
    tpu.vector_store %arg7[%c0_5, %c0_6], %8 {strides = array<i32>} : memref<64x64xf32, #tpu.memory_space<vmem>>, vector<64x16xf32>,
    %10 = vector.extract_strided_slice %6 {offsets = [0, 1, 0], sizes = [8, 8, 16], strides = [1, 1, 1]} : vector<9x9x16xf32> to vector<8x8x16xf32>
    %11 = vector.shape_cast %10 : vector<8x8x16xf32> to vector<64x16xf32>
    %c0_7 = arith.constant 0 : index
    %c16 = arith.constant 16 : index
    %12 = vector.load %arg7[%c0_7, %c16] : memref<64x64xf32, #tpu.memory_space<vmem>>, vector<64x16xf32>
    tpu.vector_store %arg7[%c0_7, %c16], %11 {strides = array<i32>} : memref<64x64xf32, #tpu.memory_space<vmem>>, vector<64x16xf32>,
    %13 = vector.extract_strided_slice %6 {offsets = [1, 0, 0], sizes = [8, 8, 16], strides = [1, 1, 1]} : vector<9x9x16xf32> to vector<8x8x16xf32>
    %14 = vector.shape_cast %13 : vector<8x8x16xf32> to vector<64x16xf32>
    %c0_8 = arith.constant 0 : index
    %c32 = arith.constant 32 : index
    %15 = vector.load %arg7[%c0_8, %c32] : memref<64x64xf32, #tpu.memory_space<vmem>>, vector<64x16xf32>
    tpu.vector_store %arg7[%c0_8, %c32], %14 {strides = array<i32>} : memref<64x64xf32, #tpu.memory_space<vmem>>, vector<64x16xf32>,
    %16 = vector.extract_strided_slice %6 {offsets = [1, 1, 0], sizes = [8, 8, 16], strides = [1, 1, 1]} : vector<9x9x16xf32> to vector<8x8x16xf32>
    %17 = vector.shape_cast %16 : vector<8x8x16xf32> to vector<64x16xf32>
    %c0_9 = arith.constant 0 : index
    %c48 = arith.constant 48 : index
    %18 = vector.load %arg7[%c0_9, %c48] : memref<64x64xf32, #tpu.memory_space<vmem>>, vector<64x16xf32>
    tpu.vector_store %arg7[%c0_9, %c48], %17 {strides = array<i32>} : memref<64x64xf32, #tpu.memory_space<vmem>>, vector<64x16xf32>,
    %c0_10 = arith.constant 0 : index
    %c0_11 = arith.constant 0 : index
    %19 = vector.load %arg3[%c0_10, %c0_11] : memref<8x64xf32, #tpu.memory_space<vmem>>, vector<8x64xf32>
    %c0_12 = arith.constant 0 : index
    %c0_13 = arith.constant 0 : index
    %20 = vector.load %arg7[%c0_12, %c0_13] : memref<64x64xf32, #tpu.memory_space<vmem>>, vector<64x64xf32>
    %cst_14 = arith.constant dense<0.000000e+00> : vector<8x64xf32>
    %21 = tpu.matmul %19, %20, %cst_14 {dimension_numbers = #tpu.dot_dimension_numbers<[1], [1], [0], [0], [0, 0, 1, 0], [], []>} : vector<8x64xf32>, vector<64x64xf32>, vector<8x64xf32> -> vector<8x64xf32>
    %c0_15 = arith.constant 0 : index
    %c0_16 = arith.constant 0 : index
    %c0_17 = arith.constant 0 : index
    %22 = vector.load %arg4[%c0_15, %c0_16, %c0_17] : memref<1x8x64xf32, #tpu.memory_space<vmem>>, vector<1x8x64xf32>
    %23 = vector.shape_cast %22 : vector<1x8x64xf32> to vector<8x64xf32>
    %24 = vector.shape_cast %21 : vector<8x64xf32> to vector<1x8x64xf32>
    tpu.vector_store %arg4[%c0_15, %c0_16, %c0_17], %24 {strides = array<i32>} : memref<1x8x64xf32, #tpu.memory_space<vmem>>, vector<1x8x64xf32>,
    %cst_18 = arith.constant dense<0.000000e+00> : vector<8xf32>
    %25 = vector.multi_reduction <add>, %21, %cst_18 [1] : vector<8x64xf32> to vector<8xf32>
    %26 = vector.shape_cast %25 : vector<8xf32> to vector<8x1xf32>
    %c0_19 = arith.constant 0 : index
    %c0_20 = arith.constant 0 : index
    %c0_21 = arith.constant 0 : index
    %c0_22 = arith.constant 0 : index
    %27 = vector.load %arg5[%c0_19, %c0_20, %c0_21, %c0_22] : memref<1x1x8x1xf32, #tpu.memory_space<vmem>>, vector<1x1x8x1xf32>
    %28 = vector.shape_cast %27 : vector<1x1x8x1xf32> to vector<8x1xf32>
    %29 = vector.shape_cast %26 : vector<8x1xf32> to vector<1x1x8x1xf32>
    tpu.vector_store %arg5[%c0_19, %c0_20, %c0_21, %c0_22], %29 {strides = array<i32>} : memref<1x1x8x1xf32, #tpu.memory_space<vmem>>, vector<1x1x8x1xf32>,
    %30 = arith.mulf %21, %21 : vector<8x64xf32>
    %cst_23 = arith.constant dense<0.000000e+00> : vector<8xf32>
    %31 = vector.multi_reduction <add>, %30, %cst_23 [1] : vector<8x64xf32> to vector<8xf32>
    %32 = vector.shape_cast %31 : vector<8xf32> to vector<8x1xf32>
    %c0_24 = arith.constant 0 : index
    %c0_25 = arith.constant 0 : index
    %c0_26 = arith.constant 0 : index
    %c0_27 = arith.constant 0 : index
    %33 = vector.load %arg6[%c0_24, %c0_25, %c0_26, %c0_27] : memref<1x1x8x1xf32, #tpu.memory_space<vmem>>, vector<1x1x8x1xf32>
    %34 = vector.shape_cast %33 : vector<1x1x8x1xf32> to vector<8x1xf32>
    %35 = vector.shape_cast %32 : vector<8x1xf32> to vector<1x1x8x1xf32>
    tpu.vector_store %arg6[%c0_24, %c0_25, %c0_26, %c0_27], %35 {strides = array<i32>} : memref<1x1x8x1xf32, #tpu.memory_space<vmem>>, vector<1x1x8x1xf32>,
    return
  }
  func.func @transform_0(%arg0: i32, %arg1: i32) -> (i32, i32, i32, i32, i32) {
    %c0_i32 = arith.constant 0 : i32
    %c0_i32_0 = arith.constant 0 : i32
    %c0_i32_1 = arith.constant 0 : i32
    %c0_i32_2 = arith.constant 0 : i32
    return %arg0, %arg1, %c0_i32, %c0_i32_0, %c0_i32_1 : i32, i32, i32, i32, i32
  }
  func.func @transform_1(%arg0: i32, %arg1: i32) -> (i32, i32) {
    %c0_i32 = arith.constant 0 : i32
    %c0_i32_0 = arith.constant 0 : i32
    %c0_i32_1 = arith.constant 0 : i32
    return %c0_i32, %c0_i32_0 : i32, i32
  }
  func.func @transform_2(%arg0: i32, %arg1: i32) -> (i32, i32, i32) {
    %c0_i32 = arith.constant 0 : i32
    %c0_i32_0 = arith.constant 0 : i32
    return %arg0, %c0_i32, %arg1 : i32, i32, i32
  }
  func.func @transform_3(%arg0: i32, %arg1: i32) -> (i32, i32, i32, i32) {
    %c0_i32 = arith.constant 0 : i32
    %c0_i32_0 = arith.constant 0 : i32
    %c0_i32_1 = arith.constant 0 : i32
    return %arg0, %arg1, %c0_i32, %c0_i32_0 : i32, i32, i32, i32
  }
  func.func @transform_4(%arg0: i32, %arg1: i32) -> (i32, i32, i32, i32) {
    %c0_i32 = arith.constant 0 : i32
    %c0_i32_0 = arith.constant 0 : i32
    %c0_i32_1 = arith.constant 0 : i32
    return %arg0, %arg1, %c0_i32, %c0_i32_0 : i32, i32, i32, i32
  }
}

</mosaic_0001>

<llo_original>
// kernel: tpu_custom_call.1
$region0: #{tpu_custom_call.1}
  #allocation0 [shape = 'u32[]', space=smem, size = 0x4, offset = 0x4, fixed_abs, tag = 'smem constant byte address 0x4 - core index']
  #allocation1 [shape = 'u32[144,128]{1,0:T(1,128)}', space=vmem, size = 0x12000, scoped, tag = 'internal scratch']
  #allocation2 [shape = 'f32[64,64]{1,0:T(8,128)}', space=vmem, size = 0x8000, scoped, tag = 'scratch operand']
  %s0 = inlined_call_operand.vmem [shape: f32[2,1,9,9,16], index: 0, kind: input, shape index: {}]
  %s1 = inlined_call_operand.vmem [shape: f32[8,64], index: 1, kind: input, shape index: {}]
  %s2 = inlined_call_operand.hbm [shape: f32[2,8,64], index: 2, kind: output, shape index: {0}]
  %s3 = inlined_call_operand.vmem [shape: f32[2,1,8,1], index: 3, kind: output, shape index: {1}]
  %s4 = inlined_call_operand.vmem [shape: f32[2,1,8,1], index: 4, kind: output, shape index: {2}]
  %5 = xla_tuple %s2, %s3, %s4
  %s6 = sld [smem:[#allocation0]]
  $region57: #{tpu_custom_call.1} parent=0
    _
  %s8 = ssub.s32 1, %s6
  %s9 = scalar_select 0, %s8, %s6
  $region1: #{tpu_custom_call.1} parent=0
    #allocation3 [shape = 'u8[8192]{0}', space=vmem, size = 0x2000, scoped, tag = 'output window, operand 0']
    #allocation4 [shape = 's32[2]{0}', space=sflag, size = 0x8, scoped, tag = 'scoped memory for tpu_custom_call.1']
    %10 = vsyncpa [#allocation4], 0
    %s11 = scalar_lea.sflag [#allocation4], 1
    %12 = vsyncpa %s11, 0
    loop: start=0, step=1, limit=4
    $region2: #{tpu_custom_call.1} parent=1 // loop_pre_header
      _
    $region3: #{tpu_custom_call.1} parent=1 // loop_header
      %s14 = sphi 0, %s18
      %p15 = scmp.ge.s32.totalorder %s14, 4
      %s21 = sphi 0, %s33
      %s22 = sphi 0, %s29
      %s23 = sphi 0, %s21
      %s24 = sphi 0, %s22
      %s25 = sphi 0, %s23
      %s26 = sphi 0, %s24
      %s38 = sphi 0, %s40
      %s41 = sphi 0, %s38
      %s42 = sphi 0, %s41
      %s58 = sphi 0, %s42
      %s62 = sphi 0, %s62
      %s64 = sphi 0, %s62
      %s65 = sphi 0, %s64
      %s79 = sphi 0, %s65
      %s87 = sphi 0, %s89
      %s90 = sphi 0, %s87
      %s91 = sphi 0, %s90
      %s107 = sphi 0, %s91
      %s115 = sphi 0, %s117
      %s118 = sphi 0, %s115
      %s119 = sphi 0, %s118
      %s135 = sphi 0, %s119
      %s143 = sphi 0, %s145
      %s146 = sphi 0, %s143
      %s147 = sphi 0, %s146
      %s163 = sphi 0, %s147
    $region4: #{tpu_custom_call.1} parent=1 // loop_header_branch
      %17 = sbr.rel (%p15) target = $region8
    $region5: #{tpu_custom_call.1} parent=1 // loop_body
      %s19 = ssub.s32 %s14, 1
      %s20 = ssub.s32 %s14, 2
      %s27 = sadd.s32 1, %s22
      %p28 = scmp.ge.s32.totalorder %s27, 1
      %s29 = scalar_select %p28, 0, %s27
      %s30 = sadd.s32 1, %s21
      %s31 = scalar_select %p28, %s30, %s21
      %p32 = scmp.ge.s32.totalorder %s31, 2
      %s33 = scalar_select %p32, 0, %s31
      %s34 = ssub.s32 %s21, %s33
      %s35 = ssub.s32 %s22, %s29
      %s36 = sor.u32 %s34, %s35
      %p37 = scmp.eq.s32.totalorder %s36, 0
      %s39 = sadd.s32 %s38, 1
      %s40 = scalar_select %p37, %s38, %s39
      %p43 = pneg %p37
      %p44 = scmp.eq.s32.totalorder %s14, 1
      %p45 = por %p43, %p44
      %p46 = scmp.ne.s32.totalorder %s38, %s41
      %p47 = scmp.eq.s32.totalorder %s14, 0
      %p48 = por %p46, %p47
      %p49 = scmp.ne.s32.totalorder %s38, %s41
      %p50 = scmp.eq.s32.totalorder %s19, 1
      %p51 = por %p49, %p50
      %p52 = scmp.ne.s32.totalorder %s41, %s42
      %p53 = scmp.eq.s32.totalorder %s19, 0
      %p54 = por %p52, %p53
      %p55 = scmp.ne.s32.totalorder %s41, %s42
      %p56 = scmp.eq.s32.totalorder %s20, 1
      %p57 = por %p55, %p56
      %p59 = scmp.ne.s32.totalorder %s42, %s58
      %p60 = scmp.eq.s32.totalorder %s20, 0
      %p61 = por %p59, %p60
      %s63 = sadd.s32 %s62, 1
      %p66 = scmp.eq.s32.totalorder %s14, 1
      %p67 = scmp.ne.s32.totalorder %s62, %s64
      %p68 = scmp.eq.s32.totalorder %s14, 0
      %p69 = por %p67, %p68
      %p70 = scmp.ne.s32.totalorder %s62, %s64
      %p71 = scmp.eq.s32.totalorder %s19, 1
      %p72 = por %p70, %p71
      %p73 = scmp.ne.s32.totalorder %s64, %s65
      %p74 = scmp.eq.s32.totalorder %s19, 0
      %p75 = por %p73, %p74
      %p76 = scmp.ne.s32.totalorder %s64, %s65
      %p77 = scmp.eq.s32.totalorder %s20, 1
      %p78 = por %p76, %p77
      %p80 = scmp.ne.s32.totalorder %s65, %s79
      %p81 = scmp.eq.s32.totalorder %s20, 0
      %p82 = por %p80, %p81
      %s83 = ssub.s32 %s21, %s33
      %s84 = ssub.s32 %s22, %s29
      %s85 = sor.u32 %s83, %s84
      %p86 = scmp.eq.s32.totalorder %s85, 0
      %s88 = sadd.s32 %s87, 1
      %s89 = scalar_select %p86, %s87, %s88
      %p92 = pneg %p86
      %p93 = scmp.eq.s32.totalorder %s14, 1
      %p94 = por %p92, %p93
      %p95 = scmp.ne.s32.totalorder %s87, %s90
      %p96 = scmp.eq.s32.totalorder %s14, 0
      %p97 = por %p95, %p96
      %p98 = scmp.ne.s32.totalorder %s87, %s90
      %p99 = scmp.eq.s32.totalorder %s19, 1
      %p100 = por %p98, %p99
      %p101 = scmp.ne.s32.totalorder %s90, %s91
      %p102 = scmp.eq.s32.totalorder %s19, 0
      %p103 = por %p101, %p102
      %p104 = scmp.ne.s32.totalorder %s90, %s91
      %p105 = scmp.eq.s32.totalorder %s20, 1
      %p106 = por %p104, %p105
      %p108 = scmp.ne.s32.totalorder %s91, %s107
      %p109 = scmp.eq.s32.totalorder %s20, 0
      %p110 = por %p108, %p109
      %s111 = ssub.s32 %s21, %s33
      %s112 = ssub.s32 %s22, %s29
      %s113 = sor.u32 %s111, %s112
      %p114 = scmp.eq.s32.totalorder %s113, 0
      %s116 = sadd.s32 %s115, 1
      %s117 = scalar_select %p114, %s115, %s116
      %p120 = pneg %p114
      %p121 = scmp.eq.s32.totalorder %s14, 1
      %p122 = por %p120, %p121
      %p123 = scmp.ne.s32.totalorder %s115, %s118
      %p124 = scmp.eq.s32.totalorder %s14, 0
      %p125 = por %p123, %p124
      %p126 = scmp.ne.s32.totalorder %s115, %s118
      %p127 = scmp.eq.s32.totalorder %s19, 1
      %p128 = por %p126, %p127
      %p129 = scmp.ne.s32.totalorder %s118, %s119
      %p130 = scmp.eq.s32.totalorder %s19, 0
      %p131 = por %p129, %p130
      %p132 = scmp.ne.s32.totalorder %s118, %s119
      %p133 = scmp.eq.s32.totalorder %s20, 1
      %p134 = por %p132, %p133
      %p136 = scmp.ne.s32.totalorder %s119, %s135
      %p137 = scmp.eq.s32.totalorder %s20, 0
      %p138 = por %p136, %p137
      %s139 = ssub.s32 %s21, %s33
      %s140 = ssub.s32 %s22, %s29
      %s141 = sor.u32 %s139, %s140
      %p142 = scmp.eq.s32.totalorder %s141, 0
      %s144 = sadd.s32 %s143, 1
      %s145 = scalar_select %p142, %s143, %s144
      %p148 = pneg %p142
      %p149 = scmp.eq.s32.totalorder %s14, 1
      %p150 = por %p148, %p149
      %p151 = scmp.ne.s32.totalorder %s143, %s146
      %p152 = scmp.eq.s32.totalorder %s14, 0
      %p153 = por %p151, %p152
      %p154 = scmp.ne.s32.totalorder %s143, %s146
      %p155 = scmp.eq.s32.totalorder %s19, 1
      %p156 = por %p154, %p155
      %p157 = scmp.ne.s32.totalorder %s146, %s147
      %p158 = scmp.eq.s32.totalorder %s19, 0
      %p159 = por %p157, %p158
      %p160 = scmp.ne.s32.totalorder %s146, %s147
      %p161 = scmp.eq.s32.totalorder %s20, 1
      %p162 = por %p160, %p161
      %p164 = scmp.ne.s32.totalorder %s147, %s163
      %p165 = scmp.eq.s32.totalorder %s20, 0
      %p166 = por %p164, %p165
      %p167 = scmp.le.s32.totalorder 1, %s14
      %p168 = scmp.lt.s32.totalorder %s14, 3
      %p169 = pnand %p167, %p168
      %p170 = pneg %p169
      // Predicated region
      $region9: #{tpu_custom_call.1} parent=5 // pred_check
        _
      $region10: #{tpu_custom_call.1} parent=5 // pred_check_branch
        %172 = sbr.rel (%p169) target = $region12
      $region11: #{tpu_custom_call.1} parent=5 // pred_region
        %s173 = ssub.s32 %s14, 1
        // Predicated region
        $region13: #{tpu_custom_call.1} parent=11 // pred_check
          %p174 = pneg %p75
        $region14: #{tpu_custom_call.1} parent=11 // pred_check_branch
          %176 = sbr.rel (%p174) target = $region16
        $region15: #{tpu_custom_call.1} parent=11 // pred_region
          _
        $region16: #{tpu_custom_call.1} parent=11 // pred_fallthru
          _
      $region12: #{tpu_custom_call.1} parent=5 // pred_fallthru
        _
      %p177 = scmp.lt.s32.totalorder %s14, 2
      // Predicated region
      $region17: #{tpu_custom_call.1} parent=5 // pred_check
        %p178 = pneg %p177
      $region18: #{tpu_custom_call.1} parent=5 // pred_check_branch
        %180 = sbr.rel (%p178) target = $region20
      $region19: #{tpu_custom_call.1} parent=5 // pred_region
        // Predicated region
        $region21: #{tpu_custom_call.1} parent=19 // pred_check
          %p181 = pneg %p48
        $region22: #{tpu_custom_call.1} parent=19 // pred_check_branch
          %183 = sbr.rel (%p181) target = $region24
        $region23: #{tpu_custom_call.1} parent=19 // pred_region
          %p184 = scmp.lt.s32.totalorder %s21, 1
          %s185 = scalar_select %p184, %s21, 1
          %p186 = scmp.lt.s32.totalorder %s22, 0
          %s187 = scalar_select %p186, %s22, 0
          %s188 = smul.addr %s187, 18
          %s189 = smul.addr %s185, 18
          %s190 = sadd.s32 %s188, %s189
          %s191 = smul.addr %s190, 8
          %s192 = scalar_lea.vmem %s0, %s191
        $region24: #{tpu_custom_call.1} parent=19 // pred_fallthru
          _
      $region20: #{tpu_custom_call.1} parent=5 // pred_fallthru
        _
      %p193 = scmp.le.s32.totalorder 1, %s14
      %p194 = scmp.lt.s32.totalorder %s14, 3
      %p195 = pnand %p193, %p194
      %p196 = pneg %p195
      // Predicated region
      $region25: #{tpu_custom_call.1} parent=5 // pred_check
        _
      $region26: #{tpu_custom_call.1} parent=5 // pred_check_branch
        %198 = sbr.rel (%p195) target = $region28
      $region27: #{tpu_custom_call.1} parent=5 // pred_region
        %s199 = ssub.s32 %s14, 1
        %p200 = scmp.lt.s32.totalorder %s23, 1
        %s201 = scalar_select %p200, %s23, 1
        %p202 = scmp.lt.s32.totalorder %s24, 0
        %s203 = scalar_select %p202, %s24, 0
        %s204 = smul.addr %s203, 18
        %s205 = smul.addr %s201, 18
        %s206 = sadd.s32 %s204, %s205
        %s207 = smul.addr %s206, 8
        %s208 = scalar_lea.vmem %s0, %s207
        %p209 = pneg %p54
        %p210 = pneg %p51
        %p211 = pneg %p75
        %p212 = pneg %p72
        %p213 = pneg %p103
        %p214 = pneg %p100
        %s215 = sand.u32 %s90, 1
        %s216 = scalar_lea.sflag [#allocation4], %s215
        %s217 = sand.u32 %s90, 1
        %s218 = smul.addr %s217, 8
        %s219 = scalar_lea.vmem [#allocation3], %s218
        %p220 = pneg %p131
        %p221 = pneg %p128
        %p222 = scmp.lt.s32.totalorder %s23, 1
        %s223 = scalar_select %p222, %s23, 1
        %p224 = scmp.lt.s32.totalorder %s24, 0
        %s225 = scalar_select %p224, %s24, 0
        %s226 = sadd.s32 %s225, %s223
        %s227 = smul.addr %s226, 8
        %s228 = scalar_lea.vmem %s3, %s227
        %p229 = pneg %p159
        %p230 = pneg %p156
        %p231 = scmp.lt.s32.totalorder %s23, 1
        %s232 = scalar_select %p231, %s23, 1
        %p233 = scmp.lt.s32.totalorder %s24, 0
        %s234 = scalar_select %p233, %s24, 0
        %s235 = sadd.s32 %s234, %s232
        %s236 = smul.addr %s235, 8
        %s237 = scalar_lea.vmem %s4, %s236
        %p238 = scmp.lt.s32.totalorder %s23, 1
        %s239 = scalar_select %p238, %s23, 1
        %p240 = scmp.lt.s32.totalorder %s24, 0
        %s241 = scalar_select %p240, %s24, 0
        %s242 = smul.addr %s241, 18
        %s243 = smul.addr %s239, 18
        %s244 = sadd.s32 %s242, %s243
        %s245 = smul.addr %s244, 8
        %s246 = scalar_lea.vmem %s0, %s245
        %p247 = scmp.lt.s32.totalorder %s23, 1
        %s248 = scalar_select %p247, %s23, 1
        %p249 = scmp.lt.s32.totalorder %s24, 0
        %s250 = scalar_select %p249, %s24, 0
        %s251 = sadd.s32 %s250, %s248
        %s252 = smul.addr %s251, 8
        %s253 = scalar_lea.vmem %s3, %s252
        %p254 = scmp.lt.s32.totalorder %s23, 1
        %s255 = scalar_select %p254, %s23, 1
        %p256 = scmp.lt.s32.totalorder %s24, 0
        %s257 = scalar_select %p256, %s24, 0
        %s258 = sadd.s32 %s257, %s255
        %s259 = smul.addr %s258, 8
        %s260 = scalar_lea.vmem %s4, %s259
        %v261 = vld [vmem:[%s246] sm:$0xff]
        %v262 = vld [vmem:[%s246 + $0x8] sm:$0x1]
        %v263 = vld [vmem:[%s246 + $0x10] sm:$0xff]
        %v264 = vld [vmem:[%s246 + $0x18] sm:$0x1]
        %v265 = vld [vmem:[%s246 + $0x20] sm:$0xff]
        %v266 = vld [vmem:[%s246 + $0x28] sm:$0x1]
        %v267 = vld [vmem:[%s246 + $0x30] sm:$0xff]
        %v268 = vld [vmem:[%s246 + $0x38] sm:$0x1]
        %v269 = vld [vmem:[%s246 + $0x40] sm:$0xff]
        %v270 = vld [vmem:[%s246 + $0x48] sm:$0x1]
        %v271 = vld [vmem:[%s246 + $0x50] sm:$0xff]
        %v272 = vld [vmem:[%s246 + $0x58] sm:$0x1]
        %v273 = vld [vmem:[%s246 + $0x60] sm:$0xff]
        %v274 = vld [vmem:[%s246 + $0x68] sm:$0x1]
        %v275 = vld [vmem:[%s246 + $0x70] sm:$0xff]
        %v276 = vld [vmem:[%s246 + $0x78] sm:$0x1]
        %v277 = vld [vmem:[%s246 + $0x80] sm:$0xff]
        %v278 = vld [vmem:[%s246 + $0x88] sm:$0x1]
        %vm279 = vcmp.ge.f32.partialorder %v261, 0.0
        %vm280 = vcmp.ge.f32.partialorder %v262, 0.0
        %vm281 = vcmp.ge.f32.partialorder %v263, 0.0
        %vm282 = vcmp.ge.f32.partialorder %v264, 0.0
        %vm283 = vcmp.ge.f32.partialorder %v265, 0.0
        %vm284 = vcmp.ge.f32.partialorder %v266, 0.0
        %vm285 = vcmp.ge.f32.partialorder %v267, 0.0
        %vm286 = vcmp.ge.f32.partialorder %v268, 0.0
        %vm287 = vcmp.ge.f32.partialorder %v269, 0.0
        %vm288 = vcmp.ge.f32.partialorder %v270, 0.0
        %vm289 = vcmp.ge.f32.partialorder %v271, 0.0
        %vm290 = vcmp.ge.f32.partialorder %v272, 0.0
        %vm291 = vcmp.ge.f32.partialorder %v273, 0.0
        %vm292 = vcmp.ge.f32.partialorder %v274, 0.0
        %vm293 = vcmp.ge.f32.partialorder %v275, 0.0
        %vm294 = vcmp.ge.f32.partialorder %v276, 0.0
        %vm295 = vcmp.ge.f32.partialorder %v277, 0.0
        %vm296 = vcmp.ge.f32.partialorder %v278, 0.0
        %v297 = vmul.f32 %v261, 0.2
        %v298 = vmul.f32 %v262, 0.2
        %v299 = vmul.f32 %v263, 0.2
        %v300 = vmul.f32 %v264, 0.2
        %v301 = vmul.f32 %v265, 0.2
        %v302 = vmul.f32 %v266, 0.2
        %v303 = vmul.f32 %v267, 0.2
        %v304 = vmul.f32 %v268, 0.2
        %v305 = vmul.f32 %v269, 0.2
        %v306 = vmul.f32 %v270, 0.2
        %v307 = vmul.f32 %v271, 0.2
        %v308 = vmul.f32 %v272, 0.2
        %v309 = vmul.f32 %v273, 0.2
        %v310 = vmul.f32 %v274, 0.2
        %v311 = vmul.f32 %v275, 0.2
        %v312 = vmul.f32 %v276, 0.2
        %v313 = vmul.f32 %v277, 0.2
        %v314 = vmul.f32 %v278, 0.2
        %v315 = vsel %vm279, %v261, %v297
        %v316 = vsel %vm280, %v262, %v298
        %v317 = vsel %vm281, %v263, %v299
        %v318 = vsel %vm282, %v264, %v300
        %v319 = vsel %vm283, %v265, %v301
        %v320 = vsel %vm284, %v266, %v302
        %v321 = vsel %vm285, %v267, %v303
        %v322 = vsel %vm286, %v268, %v304
        %v323 = vsel %vm287, %v269, %v305
        %v324 = vsel %vm288, %v270, %v306
        %v325 = vsel %vm289, %v271, %v307
        %v326 = vsel %vm290, %v272, %v308
        %v327 = vsel %vm291, %v273, %v309
        %v328 = vsel %vm292, %v274, %v310
        %v329 = vsel %vm293, %v275, %v311
        %v330 = vsel %vm294, %v276, %v312
        %v331 = vsel %vm295, %v277, %v313
        %v332 = vsel %vm296, %v278, %v314
        %vm333 = vcmask 130048
        %334 = vst.msk [vmem:[#allocation2] sm:$0xff] %vm333, %v315
        %335 = vst.msk [vmem:[#allocation2 + $0x8] sm:$0xff] %vm333, %v317
        %336 = vst.msk [vmem:[#allocation2 + $0x10] sm:$0xff] %vm333, %v319
        %337 = vst.msk [vmem:[#allocation2 + $0x18] sm:$0xff] %vm333, %v321
        %338 = vst.msk [vmem:[#allocation2 + $0x20] sm:$0xff] %vm333, %v323
        %339 = vst.msk [vmem:[#allocation2 + $0x28] sm:$0xff] %vm333, %v325
        %340 = vst.msk [vmem:[#allocation2 + $0x30] sm:$0xff] %vm333, %v327
        %341 = vst.msk [vmem:[#allocation2 + $0x38] sm:$0xff] %vm333, %v329
        %vm358 = vcmask 1046528
        %v359 = vrot.slane %v315, 1
        %v360 = vrot.slane %v316, 1
        %v361 = vsel %vm358, %v359, %v360
        %v362 = vrot.slane %v317, 1
        %v363 = vrot.slane %v318, 1
        %v364 = vsel %vm358, %v362, %v363
        %v365 = vrot.slane %v319, 1
        %v366 = vrot.slane %v320, 1
        %v367 = vsel %vm358, %v365, %v366
        %v368 = vrot.slane %v321, 1
        %v369 = vrot.slane %v322, 1
        %v370 = vsel %vm358, %v368, %v369
        %v371 = vrot.slane %v323, 1
        %v372 = vrot.slane %v324, 1
        %v373 = vsel %vm358, %v371, %v372
        %v374 = vrot.slane %v325, 1
        %v375 = vrot.slane %v326, 1
        %v376 = vsel %vm358, %v374, %v375
        %v377 = vrot.slane %v327, 1
        %v378 = vrot.slane %v328, 1
        %v379 = vsel %vm358, %v377, %v378
        %v380 = vrot.slane %v329, 1
        %v381 = vrot.slane %v330, 1
        %v382 = vsel %vm358, %v380, %v381
        %383 = vrot.lane.b32.xlu0 %v361, 16
        %v384 = vpop.permute.xlu0 %383
        %385 = vrot.lane.b32.xlu0 %v364, 16
        %v386 = vpop.permute.xlu0 %385
        %387 = vrot.lane.b32.xlu0 %v367, 16
        %v388 = vpop.permute.xlu0 %387
        %389 = vrot.lane.b32.xlu0 %v370, 16
        %v390 = vpop.permute.xlu0 %389
        %391 = vrot.lane.b32.xlu0 %v373, 16
        %v392 = vpop.permute.xlu0 %391
        %393 = vrot.lane.b32.xlu0 %v376, 16
        %v394 = vpop.permute.xlu0 %393
        %395 = vrot.lane.b32.xlu0 %v379, 16
        %v396 = vpop.permute.xlu0 %395
        %397 = vrot.lane.b32.xlu0 %v382, 16
        %v398 = vpop.permute.xlu0 %397
        %vm407 = vcmask 261248
        %408 = vst.msk [vmem:[#allocation2] sm:$0xff] %vm407, %v384
        %409 = vst.msk [vmem:[#allocation2 + $0x8] sm:$0xff] %vm407, %v386
        %410 = vst.msk [vmem:[#allocation2 + $0x10] sm:$0xff] %vm407, %v388
        %411 = vst.msk [vmem:[#allocation2 + $0x18] sm:$0xff] %vm407, %v390
        %412 = vst.msk [vmem:[#allocation2 + $0x20] sm:$0xff] %vm407, %v392
        %413 = vst.msk [vmem:[#allocation2 + $0x28] sm:$0xff] %vm407, %v394
        %414 = vst.msk [vmem:[#allocation2 + $0x30] sm:$0xff] %vm407, %v396
        %415 = vst.msk [vmem:[#allocation2 + $0x38] sm:$0xff] %vm407, %v398
        %417 = vrot.lane.b32.xlu0 %v317, 32
        %v418 = vpop.permute.xlu0 %417
        %419 = vrot.lane.b32.xlu0 %v319, 32
        %v420 = vpop.permute.xlu0 %419
        %421 = vrot.lane.b32.xlu0 %v321, 32
        %v422 = vpop.permute.xlu0 %421
        %423 = vrot.lane.b32.xlu0 %v323, 32
        %v424 = vpop.permute.xlu0 %423
        %425 = vrot.lane.b32.xlu0 %v325, 32
        %v426 = vpop.permute.xlu0 %425
        %427 = vrot.lane.b32.xlu0 %v327, 32
        %v428 = vpop.permute.xlu0 %427
        %429 = vrot.lane.b32.xlu0 %v329, 32
        %v430 = vpop.permute.xlu0 %429
        %431 = vrot.lane.b32.xlu0 %v331, 32
        %v432 = vpop.permute.xlu0 %431
        %vm441 = vcmask 392448
        %442 = vst.msk [vmem:[#allocation2] sm:$0xff] %vm441, %v418
        %443 = vst.msk [vmem:[#allocation2 + $0x8] sm:$0xff] %vm441, %v420
        %444 = vst.msk [vmem:[#allocation2 + $0x10] sm:$0xff] %vm441, %v422
        %445 = vst.msk [vmem:[#allocation2 + $0x18] sm:$0xff] %vm441, %v424
        %446 = vst.msk [vmem:[#allocation2 + $0x20] sm:$0xff] %vm441, %v426
        %447 = vst.msk [vmem:[#allocation2 + $0x28] sm:$0xff] %vm441, %v428
        %448 = vst.msk [vmem:[#allocation2 + $0x30] sm:$0xff] %vm441, %v430
        %449 = vst.msk [vmem:[#allocation2 + $0x38] sm:$0xff] %vm441, %v432
        %v451 = vrot.slane %v331, 1
        %v452 = vrot.slane %v332, 1
        %v453 = vsel %vm358, %v451, %v452
        %454 = vrot.lane.b32.xlu0 %v364, 48
        %v455 = vpop.permute.xlu0 %454
        %456 = vrot.lane.b32.xlu0 %v367, 48
        %v457 = vpop.permute.xlu0 %456
        %458 = vrot.lane.b32.xlu0 %v370, 48
        %v459 = vpop.permute.xlu0 %458
        %460 = vrot.lane.b32.xlu0 %v373, 48
        %v461 = vpop.permute.xlu0 %460
        %462 = vrot.lane.b32.xlu0 %v376, 48
        %v463 = vpop.permute.xlu0 %462
        %464 = vrot.lane.b32.xlu0 %v379, 48
        %v465 = vpop.permute.xlu0 %464
        %466 = vrot.lane.b32.xlu0 %v382, 48
        %v467 = vpop.permute.xlu0 %466
        %468 = vrot.lane.b32.xlu0 %v453, 48
        %v469 = vpop.permute.xlu0 %468
        %vm478 = vcmask 523648
        %479 = vst.msk [vmem:[#allocation2] sm:$0xff] %vm478, %v455
        %480 = vst.msk [vmem:[#allocation2 + $0x8] sm:$0xff] %vm478, %v457
        %481 = vst.msk [vmem:[#allocation2 + $0x10] sm:$0xff] %vm478, %v459
        %482 = vst.msk [vmem:[#allocation2 + $0x18] sm:$0xff] %vm478, %v461
        %483 = vst.msk [vmem:[#allocation2 + $0x20] sm:$0xff] %vm478, %v463
        %484 = vst.msk [vmem:[#allocation2 + $0x28] sm:$0xff] %vm478, %v465
        %485 = vst.msk [vmem:[#allocation2 + $0x30] sm:$0xff] %vm478, %v467
        %486 = vst.msk [vmem:[#allocation2 + $0x38] sm:$0xff] %vm478, %v469
        %v487 = vld [vmem:[%s1] sm:$0xff]
        %v488 = vld [vmem:[#allocation2] sm:$0xff]
        %v489 = vld [vmem:[#allocation2 + $0x8] sm:$0xff]
        %v490 = vld [vmem:[#allocation2 + $0x10] sm:$0xff]
        %v491 = vld [vmem:[#allocation2 + $0x18] sm:$0xff]
        %v492 = vld [vmem:[#allocation2 + $0x20] sm:$0xff]
        %v493 = vld [vmem:[#allocation2 + $0x28] sm:$0xff]
        %v494 = vld [vmem:[#allocation2 + $0x30] sm:$0xff]
        %v495 = vld [vmem:[#allocation2 + $0x38] sm:$0xff]
        %vm496 = vcmask 523264
        %v498 = vsel %vm496, %v487, 0
        %v501 = vsel %vm496, %v488, 0
        %v504 = vsel %vm496, %v489, 0
        %v507 = vsel %vm496, %v490, 0
        %v510 = vsel %vm496, %v491, 0
        %v513 = vsel %vm496, %v492, 0
        %v516 = vsel %vm496, %v493, 0
        %v519 = vsel %vm496, %v494, 0
        %v522 = vsel %vm496, %v495, 0
        %524 = vmatprep.subr.mxu0 0.0
        %525 = vmatpush1.xpose.msra.mxu0 %v501
        %526 = vmatprep.subr.mxu0 0.0
        %527 = vmatpush1.xpose.msra.mxu0 %v504
        %528 = vmatprep.subr.mxu0 0.0
        %529 = vmatpush1.xpose.msra.mxu0 %v507
        %530 = vmatprep.subr.mxu0 0.0
        %531 = vmatpush1.xpose.msra.mxu0 %v510
        %532 = vmatprep.subr.mxu0 0.0
        %533 = vmatpush1.xpose.msra.mxu0 %v513
        %534 = vmatprep.subr.mxu0 0.0
        %535 = vmatpush1.xpose.msra.mxu0 %v516
        %536 = vmatprep.subr.mxu0 0.0
        %537 = vmatpush1.xpose.msra.mxu0 %v519
        %538 = vmatprep.subr.mxu0 0.0
        %539 = vmatpush1.xpose.msra.mxu0 %v522
        %540 = vmatprep.subr.mxu0 0.0
        %541 = vmatpush1.xpose.msra.mxu0 0.0
        %542 = vmatprep.subr.mxu0 0.0
        %543 = vmatpush1.xpose.msra.mxu0 0.0
        %544 = vmatprep.subr.mxu0 0.0
        %545 = vmatpush1.xpose.msra.mxu0 0.0
        %546 = vmatprep.subr.mxu0 0.0
        %547 = vmatpush1.xpose.msra.mxu0 0.0
        %548 = vmatprep.subr.mxu0 0.0
        %549 = vmatpush1.xpose.msra.mxu0 0.0
        %550 = vmatprep.subr.mxu0 0.0
        %551 = vmatpush1.xpose.msra.mxu0 0.0
        %552 = vmatprep.subr.mxu0 0.0
        %553 = vmatpush1.xpose.msra.mxu0 0.0
        %554 = vmatprep.subr.mxu0 0.0
        %555 = vmatpush1.xpose.msra.mxu0 0.0
        %556 = vmatprep.subr.mxu0 0.0
        %557 = vmatpush1.xpose.msra.mxu0 0.0
        %558 = vmatprep.subr.mxu0 0.0
        %559 = vmatpush1.xpose.msra.mxu0 0.0
        %560 = vmatprep.subr.mxu0 0.0
        %561 = vmatpush1.xpose.msra.mxu0 0.0
        %562 = vmatprep.subr.mxu0 0.0
        %563 = vmatpush1.xpose.msra.mxu0 0.0
        %564 = vmatprep.subr.mxu0 0.0
        %565 = vmatpush1.xpose.msra.mxu0 0.0
        %566 = vmatprep.subr.mxu0 0.0
        %567 = vmatpush1.xpose.msra.mxu0 0.0
        %568 = vmatprep.subr.mxu0 0.0
        %569 = vmatpush1.xpose.msra.mxu0 0.0
        %570 = vmatprep.subr.mxu0 0.0
        %571 = vmatpush1.xpose.msra.mxu0 0.0
        %572 = vmatprep.subr.mxu0 0.0
        %573 = vmatpush1.xpose.msra.mxu0 0.0
        %574 = vmatprep.subr.mxu0 0.0
        %575 = vmatpush1.xpose.msra.mxu0 0.0
        %576 = vmatprep.subr.mxu0 0.0
        %577 = vmatpush1.xpose.msra.mxu0 0.0
        %578 = vmatprep.subr.mxu0 0.0
        %579 = vmatpush1.xpose.msra.mxu0 0.0
        %580 = vmatprep.subr.mxu0 0.0
        %581 = vmatpush1.xpose.msra.mxu0 0.0
        %582 = vmatprep.subr.mxu0 0.0
        %583 = vmatpush1.xpose.msra.mxu0 0.0
        %584 = vmatprep.subr.mxu0 0.0
        %585 = vmatpush1.xpose.msra.mxu0 0.0
        %586 = vmatprep.subr.mxu0 0.0
        %587 = vmatpush1.xpose.msra.mxu0 0.0
        %588 = vmatprep.mubr.f32.mxu0 0.0
        %589 = vmatmul.mubr.f32.gmra.mrb[0].mxu0 %v498
        %v590 = vpop.f32.mrb[0].mxu0
        %v591 = vadd.f32 0.0, %v590
        %v592 = vpop.f32.mrb[0].mxu0
        %593 = vdwg.mxu0
        %594 = vst.msk [vmem:[%s219] sm:$0xff] %vm496, %v591
        %v595 = vsel %vm496, %v591, 0.0
        %596 = vadd.xlane.f32.xlu0 %v595
        %v597 = vpop.xlane.xlu0 %596
        %vm598 = vcmask 7168
        %599 = vst.msk [vmem:[%s253] sm:$0xff] %vm598, %v597
        %v600 = vmul.f32 %v591, %v591
        %v601 = vsel %vm496, %v600, 0.0
        %602 = vadd.xlane.f32.xlu0 %v601
        %v603 = vpop.xlane.xlu0 %602
        %604 = vst.msk [vmem:[%s260] sm:$0xff] %vm598, %v603
        %s605 = sand.u32 %s90, 1
        %s606 = scalar_lea.sflag [#allocation4], %s605
        %s607 = sand.u32 %s90, 1
        %s608 = smul.addr %s607, 8
        %s609 = scalar_lea.vmem [#allocation3], %s608
        %p610 = scmp.lt.s32.totalorder %s23, 1
        %s611 = scalar_select %p610, %s23, 1
        %p612 = scmp.lt.s32.totalorder %s24, 0
        %s613 = scalar_select %p612, %s24, 0
        %s614 = sadd.s32 %s613, %s611
        %s615 = smul.addr %s614, 8
        %s616 = scalar_lea.vmem %s3, %s615
        %p617 = scmp.lt.s32.totalorder %s23, 1
        %s618 = scalar_select %p617, %s23, 1
        %p619 = scmp.lt.s32.totalorder %s24, 0
        %s620 = scalar_select %p619, %s24, 0
        %s621 = sadd.s32 %s620, %s618
        %s622 = smul.addr %s621, 8
        %s623 = scalar_lea.vmem %s4, %s622
        // Predicated region
        $region29: #{tpu_custom_call.1} parent=27 // pred_check
          %p624 = pneg %p100
        $region30: #{tpu_custom_call.1} parent=27 // pred_check_branch
          %626 = sbr.rel (%p624) target = $region32
        $region31: #{tpu_custom_call.1} parent=27 // pred_region
          %s628 = ssub.s32 128, 128
          %629 = vsyncadd %s606, %s628
          %s630 = sadd.s32 %s24, %s23
          %s631 = smul.addr %s630, 128
          %s632 = scalar_lea.hbm %s2, %s631
          %s634 = sshll.u32 %s609, 4
          %s635 = int_to_ptr.vmem [resolvable:$true] %s634
          %637 = dma.vmem_to_hbm [thread:$0]  %s635, 128, %s632, %s606
        $region32: #{tpu_custom_call.1} parent=27 // pred_fallthru
          _
        // Predicated region
        $region33: #{tpu_custom_call.1} parent=27 // pred_check
          %p638 = pneg %p128
        $region34: #{tpu_custom_call.1} parent=27 // pred_check_branch
          %640 = sbr.rel (%p638) target = $region36
        $region35: #{tpu_custom_call.1} parent=27 // pred_region
          _
        $region36: #{tpu_custom_call.1} parent=27 // pred_fallthru
          _
        // Predicated region
        $region37: #{tpu_custom_call.1} parent=27 // pred_check
          %p641 = pneg %p156
        $region38: #{tpu_custom_call.1} parent=27 // pred_check_branch
          %643 = sbr.rel (%p641) target = $region40
        $region39: #{tpu_custom_call.1} parent=27 // pred_region
          _
        $region40: #{tpu_custom_call.1} parent=27 // pred_fallthru
          _
      $region28: #{tpu_custom_call.1} parent=5 // pred_fallthru
        _
      %p644 = scmp.le.s32.totalorder 2, %s14
      // Predicated region
      $region41: #{tpu_custom_call.1} parent=5 // pred_check
        %p645 = pneg %p644
      $region42: #{tpu_custom_call.1} parent=5 // pred_check_branch
        %647 = sbr.rel (%p645) target = $region44
      $region43: #{tpu_custom_call.1} parent=5 // pred_region
        %s648 = ssub.s32 %s14, 2
        // Predicated region
        $region45: #{tpu_custom_call.1} parent=43 // pred_check
          %p649 = pneg %p106
        $region46: #{tpu_custom_call.1} parent=43 // pred_check_branch
          %651 = sbr.rel (%p649) target = $region48
        $region47: #{tpu_custom_call.1} parent=43 // pred_region
          %s652 = sand.u32 %s91, 1
          %s653 = scalar_lea.sflag [#allocation4], %s652
          %s654 = sand.u32 %s91, 1
          %s655 = smul.addr %s654, 8
          %s656 = scalar_lea.vmem [#allocation3], %s655
          %657 = dma.done %s653, 128
        $region48: #{tpu_custom_call.1} parent=43 // pred_fallthru
          _
        // Predicated region
        $region49: #{tpu_custom_call.1} parent=43 // pred_check
          %p658 = pneg %p134
        $region50: #{tpu_custom_call.1} parent=43 // pred_check_branch
          %660 = sbr.rel (%p658) target = $region52
        $region51: #{tpu_custom_call.1} parent=43 // pred_region
          %p661 = scmp.lt.s32.totalorder %s25, 1
          %s662 = scalar_select %p661, %s25, 1
          %p663 = scmp.lt.s32.totalorder %s26, 0
          %s664 = scalar_select %p663, %s26, 0
          %s665 = sadd.s32 %s664, %s662
          %s666 = smul.addr %s665, 8
          %s667 = scalar_lea.vmem %s3, %s666
        $region52: #{tpu_custom_call.1} parent=43 // pred_fallthru
          _
        // Predicated region
        $region53: #{tpu_custom_call.1} parent=43 // pred_check
          %p668 = pneg %p162
        $region54: #{tpu_custom_call.1} parent=43 // pred_check_branch
          %670 = sbr.rel (%p668) target = $region56
        $region55: #{tpu_custom_call.1} parent=43 // pred_region
          %p671 = scmp.lt.s32.totalorder %s25, 1
          %s672 = scalar_select %p671, %s25, 1
          %p673 = scmp.lt.s32.totalorder %s26, 0
          %s674 = scalar_select %p673, %s26, 0
          %s675 = sadd.s32 %s674, %s672
          %s676 = smul.addr %s675, 8
          %s677 = scalar_lea.vmem %s4, %s676
        $region56: #{tpu_custom_call.1} parent=43 // pred_fallthru
          _
      $region44: #{tpu_custom_call.1} parent=5 // pred_fallthru
        _
    $region6: #{tpu_custom_call.1} parent=1 // loop_footer
      %s18 = sadd.s32 1, %s14
    $region7: #{tpu_custom_call.1} parent=1 // loop_footer_branch
      %13 = sbr.rel target = $region3
    $region8: #{tpu_custom_call.1} parent=1 // loop_exit
      _
    %678 = vsyncpa [#allocation4], 1
    %s679 = scalar_lea.sflag [#allocation4], 1
    %680 = vsyncpa %s679, 1

</llo_original>
